<compile_context>
chip_gen: v7x
topology: tpu7x:2x2x1
jax: 0.10.0
libtpu: 0.0.40
codegen_flags: <defaults>
</compile_context>

<pallas_src>
import functools

import jax
import jax.numpy as jnp
from jax import lax
from jax.experimental import pallas as pl
from jax.experimental.pallas import tpu as pltpu


def _round_up(n, m):
    return (n + m - 1) // m * m


def _snapmix_eq_loss_kernel(x_ref, wt_ref, b_ref, code_ref, out_ref,
                            *, actual_b, excluded_class, need_mask):
    # ---- linear layer: native-dtype x cast to bf16 at the MXU input ----
    # x: (TB, F) f32 (streamed as-is); wT: (F, C) bf16 -> plain NN matmul.
    x_bf = x_ref[...].astype(jnp.bfloat16)
    logits = jnp.dot(x_bf, wt_ref[...],
                     preferred_element_type=jnp.float32) + b_ref[...]
    tb, c = logits.shape

    col = lax.broadcasted_iota(jnp.int32, (tb, c), 1)

    # Decoded per-sample metadata: 2 = target column, 1 = bernoulli(p)=1 draw.
    code = code_ref[...].astype(jnp.int32)          # (2, TB, C)
    code_a = code[0]
    code_b = code[1]

    one_hot_a = (code_a == 2).astype(jnp.float32)
    one_hot_b = (code_b == 2).astype(jnp.float32)

    # customize_func: bernoulli draw, forced to 0 at the hard-coded excluded
    # class (column 3 in the module) and at the target column (target column
    # already excluded by the `== 2` encoding).
    keep = col != excluded_class
    wc_a = jnp.where((code_a == 1) & keep, 1.0, 0.0)
    wc_b = jnp.where((code_b == 1) & keep, 1.0, 0.0)

    # eql_weight = 1 - wc * (1 - one_hot) == 1 - wc  (wc is 0 at the target).
    # Stabilized weighted log-sum-exp with the denominator computed directly
    # as sum((1 - wc) * e) -> no cancellation when most classes are masked.
    m = jnp.max(logits, axis=1, keepdims=True)           # (TB, 1)
    e = jnp.exp(logits - m)                               # (TB, C)
    lse_a = m + jnp.log(jnp.sum((1.0 - wc_a) * e, axis=1, keepdims=True))
    lse_b = m + jnp.log(jnp.sum((1.0 - wc_b) * e, axis=1, keepdims=True))

    # per-row target log-prob under the EQL-weighted softmax (== eq_loss[i, y])
    picked_a = jnp.sum(one_hot_a * logits, axis=1, keepdims=True) - lse_a
    picked_b = jnp.sum(one_hot_b * logits, axis=1, keepdims=True) - lse_b

    if need_mask:  # static: only when B % tb != 0 (ragged last tile, no pad)
        rows = (pl.program_id(0) * tb
                + lax.broadcasted_iota(jnp.int32, (tb, 1), 0))
        valid = rows < actual_b
        # jnp.where (not multiply) so garbage tail rows cannot inject NaN/Inf.
        picked_a = jnp.where(valid, picked_a, 0.0)
        picked_b = jnp.where(valid, picked_b, 0.0)

    pa = jnp.sum(picked_a)
    pb = jnp.sum(picked_b)

    # Lane-dense per-tile partial output: sublanes 0..3 carry sum(picked_a),
    # sublanes 4..7 carry sum(picked_b).
    sub = lax.broadcasted_iota(jnp.int32, out_ref.shape, 1)
    out_ref[...] = jnp.where(sub < 4, pa, pb)


def snapmix_eq_loss_v1(x, w, bias, ya, yb, lam_a, lam_b, bern_a, bern_b,
                       *, loss_weight=1.0, excluded_class=3, block_b=1024):
    """Forward loss of SnapMixEQLossV1 (training path).

    x: (B, F) features (streamed in native dtype); w: (C, F) nn.Linear weight;
    bias: (C,); ya/yb: (B,) int targets; lam_a/lam_b: (B,); bern_a/bern_b:
    (B, C) {0,1} bernoulli draws from customize_func.  Returns scalar f32.
    """
    B, F = x.shape
    C, F2 = w.shape
    assert F == F2, "weight must be (num_classes, in_feat)"

    # ---- batch-tile selection ----
    if B <= block_b:
        tb = B                                   # single full-extent block
    else:
        tb = max(256, (min(block_b, B) // 256) * 256)
        # v7x VMEM re-budget: keep the double-buffered f32 x tile <= ~24 MiB.
        while tb > 256 and 2 * tb * F * 4 > (24 << 20):
            tb //= 2
    num_tiles = pl.cdiv(B, tb)
    need_mask = (num_tiles * tb != B)

    # ---- one-time small prep on the XLA side (no copy of x) ----
    wt = jnp.transpose(w).astype(jnp.bfloat16)           # (F, C) bf16
    bias2 = bias.reshape(1, C).astype(jnp.float32)       # (1, C)

    # Fold targets + bernoulli draws into one int8 slab:
    #   2 = target column, 1 = bernoulli draw == 1 (non-target), 0 otherwise.
    col = jnp.arange(C, dtype=jnp.int32)[None, :]
    code_a = jnp.where(col == ya.reshape(B, 1).astype(jnp.int32),
                       jnp.int8(2), (bern_a > 0.5).astype(jnp.int8))
    code_b = jnp.where(col == yb.reshape(B, 1).astype(jnp.int32),
                       jnp.int8(2), (bern_b > 0.5).astype(jnp.int8))
    code = jnp.stack([code_a, code_b], axis=0).astype(jnp.int8)  # (2, B, C)

    # ---- explicit VMEM budget (v7x: 64 MiB physical / 32 MiB default) ----
    c_lanes = max(_round_up(C, 128), 128)
    x_bytes = jnp.dtype(x.dtype).itemsize
    vmem_est = (2 * tb * F * x_bytes          # x double-buffer (native dtype)
                + 2 * 2 * tb * c_lanes        # code int8 (lane-padded)
                + 2 * F * c_lanes * 2         # wT bf16
                + 8 * tb * c_lanes * 4        # f32 intermediates headroom
                + (4 << 20))
    vmem_limit = int(min(max(vmem_est, 32 << 20), 60 << 20))

    kernel = functools.partial(
        _snapmix_eq_loss_kernel,
        actual_b=B,
        excluded_class=excluded_class,
        need_mask=need_mask,
    )

    parts = pl.pallas_call(
        kernel,
        out_shape=jax.ShapeDtypeStruct((num_tiles, 8, 128), jnp.float32),
        grid_spec=pltpu.PrefetchScalarGridSpec(
            num_scalar_prefetch=0,
            grid=(num_tiles,),
            in_specs=[
                pl.BlockSpec((tb, F), lambda i: (i, 0)),        # x (native)
                pl.BlockSpec((F, C), lambda i: (0, 0)),         # W^T (bf16)
                pl.BlockSpec((1, C), lambda i: (0, 0)),         # bias
                pl.BlockSpec((2, tb, C), lambda i: (0, i, 0)),  # code (int8)
            ],
            out_specs=pl.BlockSpec((1, 8, 128), lambda i: (i, 0, 0)),
        ),
        compiler_params=pltpu.CompilerParams(
            dimension_semantics=("parallel",),
            vmem_limit_bytes=vmem_limit),
    )(x, wt, bias2, code)

    # Tiny final reduction / lambda weighting done on the host-side XLA graph.
    sum_pa = jnp.sum(parts[:, 0, 0])
    sum_pb = jnp.sum(parts[:, 4, 0])
    nll_a = -sum_pa / B
    nll_b = -sum_pb / B
    loss = nll_a * jnp.mean(lam_a) + nll_b * jnp.mean(lam_b)
    return loss * loss_weight


def _reference_loss(x, w, bias, ya, yb, lam_a, lam_b, bern_a, bern_b, weight,
                    excluded_class=3):
    """Pure-JAX transcription of the PyTorch module (same bf16 rounding)."""
    xf = x.astype(jnp.bfloat16).astype(jnp.float32)
    wf = w.astype(jnp.bfloat16).astype(jnp.float32)
    logits = xf @ wf.T + bias[None, :]
    C = w.shape[0]
    col = jnp.arange(C)[None, :]
    one_hot_a = jax.nn.one_hot(ya, C, dtype=jnp.float32)
    one_hot_b = jax.nn.one_hot(yb, C, dtype=jnp.float32)
    wc_a = jnp.where((col == excluded_class) | (col == ya[:, None]), 0.0, bern_a)
    wc_b = jnp.where((col == excluded_class) | (col == yb[:, None]), 0.0, bern_b)
    eql_a = 1.0 - wc_a * (1.0 - one_hot_a)
    eql_b = 1.0 - wc_b * (1.0 - one_hot_b)
    e = jnp.exp(logits)
    logp_a = logits - jnp.log(jnp.sum(eql_a * e, axis=1, keepdims=True))
    logp_b = logits - jnp.log(jnp.sum(eql_b * e, axis=1, keepdims=True))
    nll_a = -jnp.mean(jnp.take_along_axis(logp_a, ya[:, None], axis=1))
    nll_b = -jnp.mean(jnp.take_along_axis(logp_b, yb[:, None], axis=1))
    loss = jnp.mean(nll_a * lam_a + nll_b * lam_b)
    return loss * weight


if __name__ == "__main__":
    # Small, module-consistent shapes (in_feat=2048 stand-in = 256).
    B = 16            # num_inputs (batch)
    IN_FEAT = 256
    NUM_CLASSES = 5
    LOSS_WEIGHT = 1.0

    key = jax.random.PRNGKey(0)
    ks = jax.random.split(key, 10)

    # nn.Linear(in_feat, num_classes) parameters, native (C, F) layout.
    w = jax.random.normal(ks[0], (NUM_CLASSES, IN_FEAT), jnp.float32) * 0.02
    bias = jax.random.normal(ks[1], (NUM_CLASSES,), jnp.float32) * 0.01

    # inputs
    x = jax.random.normal(ks[2], (B, IN_FEAT), jnp.float32)
    ya = jax.random.randint(ks[3], (B,), 0, NUM_CLASSES, jnp.int32)
    yb = jax.random.randint(ks[4], (B,), 0, NUM_CLASSES, jnp.int32)
    lam_a = jax.random.uniform(ks[5], (B,), jnp.float32)
    lam_b = 1.0 - lam_a

    # customize_func randomness: per-class bernoulli probability, iid draws
    # per element (two independent calls, for ya and yb).
    p_a = jax.random.uniform(ks[6], (1, NUM_CLASSES), jnp.float32)
    p_b = jax.random.uniform(ks[7], (1, NUM_CLASSES), jnp.float32)
    bern_a = (jax.random.uniform(ks[8], (B, NUM_CLASSES)) < p_a).astype(jnp.float32)
    bern_b = (jax.random.uniform(ks[9], (B, NUM_CLASSES)) < p_b).astype(jnp.float32)

    loss = snapmix_eq_loss_v1(x, w, bias, ya, yb, lam_a, lam_b,
                              bern_a, bern_b, loss_weight=LOSS_WEIGHT)
    loss = jax.block_until_ready(loss)

    ref = _reference_loss(x, w, bias, ya, yb, lam_a, lam_b,
                          bern_a, bern_b, LOSS_WEIGHT)

    assert loss.shape == () and bool(jnp.isfinite(loss))
    assert jnp.allclose(loss, ref, rtol=1e-2, atol=1e-2), (loss, ref)
    print("KERNEL_OK")
</pallas_src>

<mosaic_0001>
module attributes {stable_mosaic.version = 11 : i64} {
  func.func @_snapmix_eq_loss_kernel(%arg0: i32, %arg1: memref<16x256xf32, #tpu.memory_space<vmem>>, %arg2: memref<256x5xbf16, #tpu.memory_space<vmem>>, %arg3: memref<1x5xf32, #tpu.memory_space<vmem>>, %arg4: memref<2x16x5xi8, #tpu.memory_space<vmem>>, %arg5: memref<1x8x128xf32, #tpu.memory_space<vmem>>) attributes {dimension_semantics = [#tpu.dimension_semantics<parallel>], iteration_bounds = array<i64: 1>, scalar_prefetch = 0 : i64, scratch_operands = 0 : i64, tpu.core_type = #tpu.core_type<tc>, window_params = [{transform_indices = @transform_0, window_bounds = array<i64: 16, 256>}, {pipeline_mode = #tpu.pipeline_mode<synchronous>, transform_indices = @transform_1, window_bounds = array<i64: 256, 5>}, {pipeline_mode = #tpu.pipeline_mode<synchronous>, transform_indices = @transform_2, window_bounds = array<i64: 1, 5>}, {transform_indices = @transform_3, window_bounds = array<i64: 2, 16, 5>}, {transform_indices = @transform_4, window_bounds = array<i64: 1, 8, 128>}]} {
    %c0 = arith.constant 0 : index
    %c0_0 = arith.constant 0 : index
    %0 = vector.load %arg1[%c0, %c0_0] : memref<16x256xf32, #tpu.memory_space<vmem>>, vector<16x256xf32>
    %1 = arith.truncf %0 : vector<16x256xf32> to vector<16x256xbf16>
    %c0_1 = arith.constant 0 : index
    %c0_2 = arith.constant 0 : index
    %2 = vector.load %arg2[%c0_1, %c0_2] : memref<256x5xbf16, #tpu.memory_space<vmem>>, vector<256x5xbf16>
    %cst = arith.constant dense<0.000000e+00> : vector<16x5xf32>
    %3 = tpu.matmul %1, %2, %cst {dimension_numbers = #tpu.dot_dimension_numbers<[1], [0], [0], [1], [0, 0, 1, 1], [], []>} : vector<16x256xbf16>, vector<256x5xbf16>, vector<16x5xf32> -> vector<16x5xf32>
    %c0_3 = arith.constant 0 : index
    %c0_4 = arith.constant 0 : index
    %4 = vector.load %arg3[%c0_3, %c0_4] : memref<1x5xf32, #tpu.memory_space<vmem>>, vector<1x5xf32>
    %5 = vector.broadcast %4 : vector<1x5xf32> to vector<16x5xf32>
    %6 = arith.addf %3, %5 : vector<16x5xf32>
    %7 = tpu.iota {dimensions = array<i32: 1>} : vector<16x5xi32>
    %c0_5 = arith.constant 0 : index
    %c0_6 = arith.constant 0 : index
    %c0_7 = arith.constant 0 : index
    %8 = vector.load %arg4[%c0_5, %c0_6, %c0_7] : memref<2x16x5xi8, #tpu.memory_space<vmem>>, vector<2x16x5xi8>
    %9 = arith.extsi %8 : vector<2x16x5xi8> to vector<2x16x5xi32>
    %10 = vector.extract_strided_slice %9 {offsets = [0, 0, 0], sizes = [1, 16, 5], strides = [1, 1, 1]} : vector<2x16x5xi32> to vector<1x16x5xi32>
    %11 = vector.shape_cast %10 : vector<1x16x5xi32> to vector<16x5xi32>
    %12 = vector.extract_strided_slice %9 {offsets = [1, 0, 0], sizes = [1, 16, 5], strides = [1, 1, 1]} : vector<2x16x5xi32> to vector<1x16x5xi32>
    %13 = vector.shape_cast %12 : vector<1x16x5xi32> to vector<16x5xi32>
    %c2_i32 = arith.constant 2 : i32
    %14 = vector.broadcast %c2_i32 : i32 to vector<16x5xi32>
    %15 = arith.cmpi eq, %11, %14 : vector<16x5xi32>
    %16 = arith.extui %15 : vector<16x5xi1> to vector<16x5xi32>
    %17 = arith.sitofp %16 : vector<16x5xi32> to vector<16x5xf32>
    %c2_i32_8 = arith.constant 2 : i32
    %18 = vector.broadcast %c2_i32_8 : i32 to vector<16x5xi32>
    %19 = arith.cmpi eq, %13, %18 : vector<16x5xi32>
    %20 = arith.extui %19 : vector<16x5xi1> to vector<16x5xi32>
    %21 = arith.sitofp %20 : vector<16x5xi32> to vector<16x5xf32>
    %c3_i32 = arith.constant 3 : i32
    %22 = vector.broadcast %c3_i32 : i32 to vector<16x5xi32>
    %23 = arith.cmpi ne, %7, %22 : vector<16x5xi32>
    %c1_i32 = arith.constant 1 : i32
    %24 = vector.broadcast %c1_i32 : i32 to vector<16x5xi32>
    %25 = arith.cmpi eq, %11, %24 : vector<16x5xi32>
    %26 = arith.andi %25, %23 : vector<16x5xi1>
    %cst_9 = arith.constant 1.000000e+00 : f32
    %cst_10 = arith.constant 0.000000e+00 : f32
    %27 = vector.broadcast %cst_9 : f32 to vector<16x5xf32>
    %28 = vector.broadcast %cst_10 : f32 to vector<16x5xf32>
    %29 = arith.select %26, %27, %28 : vector<16x5xi1>, vector<16x5xf32>
    %c1_i32_11 = arith.constant 1 : i32
    %30 = vector.broadcast %c1_i32_11 : i32 to vector<16x5xi32>
    %31 = arith.cmpi eq, %13, %30 : vector<16x5xi32>
    %32 = arith.andi %31, %23 : vector<16x5xi1>
    %cst_12 = arith.constant 1.000000e+00 : f32
    %cst_13 = arith.constant 0.000000e+00 : f32
    %33 = vector.broadcast %cst_12 : f32 to vector<16x5xf32>
    %34 = vector.broadcast %cst_13 : f32 to vector<16x5xf32>
    %35 = arith.select %32, %33, %34 : vector<16x5xi1>, vector<16x5xf32>
    %cst_14 = arith.constant dense<0xFF800000> : vector<16xf32>
    %36 = vector.multi_reduction <maximumf>, %6, %cst_14 [1] : vector<16x5xf32> to vector<16xf32>
    %37 = vector.shape_cast %36 : vector<16xf32> to vector<16x1xf32>
    %38 = vector.broadcast %37 : vector<16x1xf32> to vector<16x5xf32>
    %39 = arith.subf %6, %38 : vector<16x5xf32>
    %40 = math.exp %39 : vector<16x5xf32>
    %cst_15 = arith.constant 1.000000e+00 : f32
    %41 = vector.broadcast %cst_15 : f32 to vector<16x5xf32>
    %42 = arith.subf %41, %29 : vector<16x5xf32>
    %43 = arith.mulf %42, %40 : vector<16x5xf32>
    %cst_16 = arith.constant dense<0.000000e+00> : vector<16xf32>
    %44 = vector.multi_reduction <add>, %43, %cst_16 [1] : vector<16x5xf32> to vector<16xf32>
    %45 = vector.shape_cast %44 : vector<16xf32> to vector<16x1xf32>
    %46 = math.log %45 : vector<16x1xf32>
    %47 = arith.addf %37, %46 : vector<16x1xf32>
    %cst_17 = arith.constant 1.000000e+00 : f32
    %48 = vector.broadcast %cst_17 : f32 to vector<16x5xf32>
    %49 = arith.subf %48, %35 : vector<16x5xf32>
    %50 = arith.mulf %49, %40 : vector<16x5xf32>
    %cst_18 = arith.constant dense<0.000000e+00> : vector<16xf32>
    %51 = vector.multi_reduction <add>, %50, %cst_18 [1] : vector<16x5xf32> to vector<16xf32>
    %52 = vector.shape_cast %51 : vector<16xf32> to vector<16x1xf32>
    %53 = math.log %52 : vector<16x1xf32>
    %54 = arith.addf %37, %53 : vector<16x1xf32>
    %55 = arith.mulf %17, %6 : vector<16x5xf32>
    %cst_19 = arith.constant dense<0.000000e+00> : vector<16xf32>
    %56 = vector.multi_reduction <add>, %55, %cst_19 [1] : vector<16x5xf32> to vector<16xf32>
    %57 = vector.shape_cast %56 : vector<16xf32> to vector<16x1xf32>
    %58 = arith.subf %57, %47 : vector<16x1xf32>
    %59 = arith.mulf %21, %6 : vector<16x5xf32>
    %cst_20 = arith.constant dense<0.000000e+00> : vector<16xf32>
    %60 = vector.multi_reduction <add>, %59, %cst_20 [1] : vector<16x5xf32> to vector<16xf32>
    %61 = vector.shape_cast %60 : vector<16xf32> to vector<16x1xf32>
    %62 = arith.subf %61, %54 : vector<16x1xf32>
    %63 = vector.shape_cast %58 : vector<16x1xf32> to vector<1x16x1xf32>
    %cst_21 = arith.constant dense<0.000000e+00> : vector<1xf32>
    %64 = vector.multi_reduction <add>, %63, %cst_21 [1, 2] : vector<1x16x1xf32> to vector<1xf32>
    %65 = vector.shape_cast %64 : vector<1xf32> to vector<1x1x1xf32>
    %66 = vector.extract %65[0, 0, 0] : f32 from vector<1x1x1xf32>
    %67 = vector.shape_cast %62 : vector<16x1xf32> to vector<1x16x1xf32>
    %cst_22 = arith.constant dense<0.000000e+00> : vector<1xf32>
    %68 = vector.multi_reduction <add>, %67, %cst_22 [1, 2] : vector<1x16x1xf32> to vector<1xf32>
    %69 = vector.shape_cast %68 : vector<1xf32> to vector<1x1x1xf32>
    %70 = vector.extract %69[0, 0, 0] : f32 from vector<1x1x1xf32>
    %71 = tpu.iota {dimensions = array<i32: 1>} : vector<1x8x128xi32>
    %c4_i32 = arith.constant 4 : i32
    %72 = vector.broadcast %c4_i32 : i32 to vector<1x8x128xi32>
    %73 = arith.cmpi slt, %71, %72 : vector<1x8x128xi32>
    %74 = vector.broadcast %66 : f32 to vector<1x8x128xf32>
    %75 = vector.broadcast %70 : f32 to vector<1x8x128xf32>
    %76 = arith.select %73, %74, %75 : vector<1x8x128xi1>, vector<1x8x128xf32>
    %c0_23 = arith.constant 0 : index
    %c0_24 = arith.constant 0 : index
    %c0_25 = arith.constant 0 : index
    %77 = vector.load %arg5[%c0_23, %c0_24, %c0_25] : memref<1x8x128xf32, #tpu.memory_space<vmem>>, vector<1x8x128xf32>
    tpu.vector_store %arg5[%c0_23, %c0_24, %c0_25], %76 {strides = array<i32>} : memref<1x8x128xf32, #tpu.memory_space<vmem>>, vector<1x8x128xf32>,
    return
  }
  func.func @transform_0(%arg0: i32) -> (i32, i32) {
    %c0_i32 = arith.constant 0 : i32
    %c0_i32_0 = arith.constant 0 : i32
    return %arg0, %c0_i32 : i32, i32
  }
  func.func @transform_1(%arg0: i32) -> (i32, i32) {
    %c0_i32 = arith.constant 0 : i32
    %c0_i32_0 = arith.constant 0 : i32
    %c0_i32_1 = arith.constant 0 : i32
    return %c0_i32, %c0_i32_0 : i32, i32
  }
  func.func @transform_2(%arg0: i32) -> (i32, i32) {
    %c0_i32 = arith.constant 0 : i32
    %c0_i32_0 = arith.constant 0 : i32
    %c0_i32_1 = arith.constant 0 : i32
    return %c0_i32, %c0_i32_0 : i32, i32
  }
  func.func @transform_3(%arg0: i32) -> (i32, i32, i32) {
    %c0_i32 = arith.constant 0 : i32
    %c0_i32_0 = arith.constant 0 : i32
    %c0_i32_1 = arith.constant 0 : i32
    return %c0_i32, %arg0, %c0_i32_0 : i32, i32, i32
  }
  func.func @transform_4(%arg0: i32) -> (i32, i32, i32) {
    %c0_i32 = arith.constant 0 : i32
    %c0_i32_0 = arith.constant 0 : i32
    %c0_i32_1 = arith.constant 0 : i32
    return %arg0, %c0_i32, %c0_i32_0 : i32, i32, i32
  }
}

</mosaic_0001>

<llo_original>
// kernel: tpu_custom_call.1
$region0: #{tpu_custom_call.1}
  #allocation0 [shape = 'u32[]', space=smem, size = 0x4, offset = 0x4, fixed_abs, tag = 'smem constant byte address 0x4 - core index']
  #allocation1 [shape = 'u32[144,128]{1,0:T(1,128)}', space=vmem, size = 0x12000, scoped, tag = 'internal scratch']
  %s0 = inlined_call_operand.vmem [shape: f32[16,256], index: 0, kind: input, shape index: {}]
  %s1 = inlined_call_operand.vmem [shape: bf16[256,5], index: 1, kind: input, shape index: {}]
  %s2 = inlined_call_operand.vmem [shape: f32[1,5], index: 2, kind: input, shape index: {}]
  %s3 = inlined_call_operand.vmem [shape: s8[2,16,5], index: 3, kind: input, shape index: {}]
  %s4 = inlined_call_operand.hbm [shape: f32[1,8,128], index: 4, kind: output, shape index: {}]
  %s5 = sld [smem:[#allocation0]]
  $region26: #{tpu_custom_call.1} parent=0
    _
  %s7 = ssub.s32 1, %s5
  %s8 = scalar_select 0, %s7, %s5
  $region1: #{tpu_custom_call.1} parent=0
    #allocation2 [shape = 'u8[4096]{0}', space=vmem, size = 0x1000, scoped, tag = 'output window, operand 0, single buffered']
    #allocation3 [shape = 's32[1]{0}', space=sflag, size = 0x4, scoped, tag = 'scoped memory for tpu_custom_call.1']
    %9 = vsyncpa [#allocation3], 0
    // Predicated region
    $region2: #{tpu_custom_call.1} parent=1 // pred_check
      _
    $region3: #{tpu_custom_call.1} parent=1 // pred_check_branch
      %11 = sbr.rel (0) target = $region5
    $region4: #{tpu_custom_call.1} parent=1 // pred_region
      _
    $region5: #{tpu_custom_call.1} parent=1 // pred_fallthru
      _
    // Predicated region
    $region6: #{tpu_custom_call.1} parent=1 // pred_check
      _
    $region7: #{tpu_custom_call.1} parent=1 // pred_check_branch
      %13 = sbr.rel (0) target = $region9
    $region8: #{tpu_custom_call.1} parent=1 // pred_region
      _
    $region9: #{tpu_custom_call.1} parent=1 // pred_fallthru
      _
    // Predicated region
    $region10: #{tpu_custom_call.1} parent=1 // pred_check
      _
    $region11: #{tpu_custom_call.1} parent=1 // pred_check_branch
      %15 = sbr.rel (0) target = $region13
    $region12: #{tpu_custom_call.1} parent=1 // pred_region
      _
    $region13: #{tpu_custom_call.1} parent=1 // pred_fallthru
      _
    // Predicated region
    $region14: #{tpu_custom_call.1} parent=1 // pred_check
      _
    $region15: #{tpu_custom_call.1} parent=1 // pred_check_branch
      %17 = sbr.rel (0) target = $region17
    $region16: #{tpu_custom_call.1} parent=1 // pred_region
      _
    $region17: #{tpu_custom_call.1} parent=1 // pred_fallthru
      _
    %v19 = vld [vmem:[%s0] sm:$0xff]
    %v20 = vld [vmem:[%s0 + $0x8] sm:$0xff]
    %v21 = vld [vmem:[%s0 + $0x10] sm:$0xff]
    %v22 = vld [vmem:[%s0 + $0x18] sm:$0xff]
    %v23 = vpack.c.bf16 %v21, %v19
    %v24 = vpack.c.bf16 %v22, %v20
    %v25 = vld [vmem:[%s1] sm:$0xf]
    %v26 = vld [vmem:[%s1 + $0x4] sm:$0xf]
    %v27 = vld [vmem:[%s1 + $0x8] sm:$0xf]
    %v28 = vld [vmem:[%s1 + $0xc] sm:$0xf]
    %v29 = vld [vmem:[%s1 + $0x10] sm:$0xf]
    %v30 = vld [vmem:[%s1 + $0x14] sm:$0xf]
    %v31 = vld [vmem:[%s1 + $0x18] sm:$0xf]
    %v32 = vld [vmem:[%s1 + $0x1c] sm:$0xf]
    %v33 = vld [vmem:[%s1 + $0x20] sm:$0xf]
    %v34 = vld [vmem:[%s1 + $0x24] sm:$0xf]
    %v35 = vld [vmem:[%s1 + $0x28] sm:$0xf]
    %v36 = vld [vmem:[%s1 + $0x2c] sm:$0xf]
    %v37 = vld [vmem:[%s1 + $0x30] sm:$0xf]
    %v38 = vld [vmem:[%s1 + $0x34] sm:$0xf]
    %v39 = vld [vmem:[%s1 + $0x38] sm:$0xf]
    %v40 = vld [vmem:[%s1 + $0x3c] sm:$0xf]
    %v41 = vld [vmem:[%s1 + $0x40] sm:$0xf]
    %v42 = vld [vmem:[%s1 + $0x44] sm:$0xf]
    %v43 = vld [vmem:[%s1 + $0x48] sm:$0xf]
    %v44 = vld [vmem:[%s1 + $0x4c] sm:$0xf]
    %v45 = vld [vmem:[%s1 + $0x50] sm:$0xf]
    %v46 = vld [vmem:[%s1 + $0x54] sm:$0xf]
    %v47 = vld [vmem:[%s1 + $0x58] sm:$0xf]
    %v48 = vld [vmem:[%s1 + $0x5c] sm:$0xf]
    %v49 = vld [vmem:[%s1 + $0x60] sm:$0xf]
    %v50 = vld [vmem:[%s1 + $0x64] sm:$0xf]
    %v51 = vld [vmem:[%s1 + $0x68] sm:$0xf]
    %v52 = vld [vmem:[%s1 + $0x6c] sm:$0xf]
    %v53 = vld [vmem:[%s1 + $0x70] sm:$0xf]
    %v54 = vld [vmem:[%s1 + $0x74] sm:$0xf]
    %v55 = vld [vmem:[%s1 + $0x78] sm:$0xf]
    %v56 = vld [vmem:[%s1 + $0x7c] sm:$0xf]
    %v57 = vld [vmem:[%s2] sm:$0x1]
    %v59 = vlaneseq
    %v60 = vshrl.u32 %v59, 7
    %v61 = vsub.s32 0, %v60
    %v62 = vrot.slane %v57, %v61
    %v96 = vunpack.c.l.b16 %v25
    %v97 = vunpack.c.l.b16 %v26
    %v98 = vunpack.c.l.b16 %v27
    %v99 = vunpack.c.l.b16 %v28
    %v100 = vunpack.c.l.b16 %v29
    %v101 = vunpack.c.l.b16 %v30
    %v102 = vunpack.c.l.b16 %v31
    %v103 = vunpack.c.l.b16 %v32
    %v104 = vunpack.c.l.b16 %v33
    %v105 = vunpack.c.l.b16 %v34
    %v106 = vunpack.c.l.b16 %v35
    %v107 = vunpack.c.l.b16 %v36
    %v108 = vunpack.c.l.b16 %v37
    %v109 = vunpack.c.l.b16 %v38
    %v110 = vunpack.c.l.b16 %v39
    %v111 = vunpack.c.l.b16 %v40
    %v112 = vunpack.c.l.b16 %v41
    %v113 = vunpack.c.l.b16 %v42
    %v114 = vunpack.c.l.b16 %v43
    %v115 = vunpack.c.l.b16 %v44
    %v116 = vunpack.c.l.b16 %v45
    %v117 = vunpack.c.l.b16 %v46
    %v118 = vunpack.c.l.b16 %v47
    %v119 = vunpack.c.l.b16 %v48
    %v120 = vunpack.c.l.b16 %v49
    %v121 = vunpack.c.l.b16 %v50
    %v122 = vunpack.c.l.b16 %v51
    %v123 = vunpack.c.l.b16 %v52
    %v124 = vunpack.c.l.b16 %v53
    %v125 = vunpack.c.l.b16 %v54
    %v126 = vunpack.c.l.b16 %v55
    %v127 = vunpack.c.l.b16 %v56
    %v128 = vpack.c.b16 %v97, %v96
    %v129 = vpack.c.b16 %v99, %v98
    %v130 = vpack.c.b16 %v101, %v100
    %v131 = vpack.c.b16 %v103, %v102
    %v132 = vpack.c.b16 %v105, %v104
    %v133 = vpack.c.b16 %v107, %v106
    %v134 = vpack.c.b16 %v109, %v108
    %v135 = vpack.c.b16 %v111, %v110
    %v136 = vpack.c.b16 %v113, %v112
    %v137 = vpack.c.b16 %v115, %v114
    %v138 = vpack.c.b16 %v117, %v116
    %v139 = vpack.c.b16 %v119, %v118
    %v140 = vpack.c.b16 %v121, %v120
    %v141 = vpack.c.b16 %v123, %v122
    %v142 = vpack.c.b16 %v125, %v124
    %v143 = vpack.c.b16 %v127, %v126
    %160 = vmatprep.subr.bf16.mxu0 0
    %161 = vmatpush1.bf16.msra.mxu0 %v128
    %162 = vmatprep.subr.bf16.mxu0 0
    %163 = vmatpush1.bf16.msra.mxu0 %v129
    %164 = vmatprep.subr.bf16.mxu0 0
    %165 = vmatpush1.bf16.msra.mxu0 %v130
    %166 = vmatprep.subr.bf16.mxu0 0
    %167 = vmatpush1.bf16.msra.mxu0 %v131
    %168 = vmatprep.subr.bf16.mxu0 0
    %169 = vmatpush1.bf16.msra.mxu0 %v132
    %170 = vmatprep.subr.bf16.mxu0 0
    %171 = vmatpush1.bf16.msra.mxu0 %v133
    %172 = vmatprep.subr.bf16.mxu0 0
    %173 = vmatpush1.bf16.msra.mxu0 %v134
    %174 = vmatprep.subr.bf16.mxu0 0
    %175 = vmatpush1.bf16.msra.mxu0 %v135
    %176 = vmatprep.subr.bf16.mxu0 0
    %177 = vmatpush1.bf16.msra.mxu0 %v136
    %178 = vmatprep.subr.bf16.mxu0 0
    %179 = vmatpush1.bf16.msra.mxu0 %v137
    %180 = vmatprep.subr.bf16.mxu0 0
    %181 = vmatpush1.bf16.msra.mxu0 %v138
    %182 = vmatprep.subr.bf16.mxu0 0
    %183 = vmatpush1.bf16.msra.mxu0 %v139
    %184 = vmatprep.subr.bf16.mxu0 0
    %185 = vmatpush1.bf16.msra.mxu0 %v140
    %186 = vmatprep.subr.bf16.mxu0 0
    %187 = vmatpush1.bf16.msra.mxu0 %v141
    %188 = vmatprep.subr.bf16.mxu0 0
    %189 = vmatpush1.bf16.msra.mxu0 %v142
    %190 = vmatprep.subr.bf16.mxu0 0
    %191 = vmatpush1.bf16.msra.mxu0 %v143
    %192 = vmatprep.mubr.bf16.mxu0 %v24
    %193 = vmatmul.mubr.bf16.gmra.mrb[0].mxu0 %v23
    %v194 = vpop.f32.mrb[0].mxu0
    %v195 = vadd.f32 %v62, %v194
    %v196 = vpop.f32.mrb[0].mxu0
    %v197 = vpop.f32.mrb[0].mxu0
    %v198 = vadd.f32 %v62, %v197
    %v199 = vpop.f32.mrb[0].mxu0
    %200 = vdwg.mxu0
    %v201 = vlaneseq
    %v202 = vand.u32 %v201, 127
    %v203 = vld [vmem:[%s3] sm:$0x3]
    %v204 = vld [vmem:[%s3 + $0x2] sm:$0x3]
    %v205 = vld [vmem:[%s3 + $0x4] sm:$0x3]
    %v206 = vld [vmem:[%s3 + $0x6] sm:$0x3]
    %v207 = vunpack.c.0.s8 %v203
    %v208 = vunpack.c.0.s8 %v204
    %v209 = vunpack.c.0.s8 %v205
    %v210 = vunpack.c.0.s8 %v206
    %vm211 = vcmp.eq.s32.totalorder %v207, 2
    %vm212 = vcmp.eq.s32.totalorder %v208, 2
    %v213 = vsel %vm211, 1, 0
    %v214 = vsel %vm212, 1, 0
    %v215 = vcvt.s32.f32 %v213
    %v216 = vcvt.s32.f32 %v214
    %vm217 = vcmp.eq.s32.totalorder %v209, 2
    %vm218 = vcmp.eq.s32.totalorder %v210, 2
    %v219 = vsel %vm217, 1, 0
    %v220 = vsel %vm218, 1, 0
    %v221 = vcvt.s32.f32 %v219
    %v222 = vcvt.s32.f32 %v220
    %vm223 = vcmp.ne.s32.totalorder %v202, 3
    %vm224 = vcmp.eq.s32.totalorder %v207, 1
    %vm225 = vcmp.eq.s32.totalorder %v208, 1
    %vm226 = vmand %vm224, %vm223
    %vm227 = vmand %vm225, %vm223
    %v228 = vsel %vm226, 1.0, 0.0
    %v229 = vsel %vm227, 1.0, 0.0
    %vm230 = vcmp.eq.s32.totalorder %v209, 1
    %vm231 = vcmp.eq.s32.totalorder %v210, 1
    %vm232 = vmand %vm230, %vm223
    %vm233 = vmand %vm231, %vm223
    %v234 = vsel %vm232, 1.0, 0.0
    %v235 = vsel %vm233, 1.0, 0.0
    %vm236 = vcmask 39936
    %v237 = vsel %vm236, %v195, -inf
    %238 = vmax.xlane.f32.xlu0 %v237
    %v239 = vpop.xlane.xlu0 %238
    %v240 = vsel %vm236, %v198, -inf
    %241 = vmax.xlane.f32.xlu0 %v240
    %v242 = vpop.xlane.xlu0 %241
    %v243 = vsub.f32 %v195, %v239
    %v244 = vsub.f32 %v198, %v242
    %v245 = vmul.f32 %v243, 1.442695
    %v246 = vpow.pop %v245
    %v247 = vmul.f32 %v244, 1.442695
    %v248 = vpow.pop %v247
    %v249 = vsub.f32 1.0, %v228
    %v250 = vsub.f32 1.0, %v229
    %v251 = vmul.f32 %v249, %v246
    %v252 = vmul.f32 %v250, %v248
    %v253 = vsel %vm236, %v251, 0.0
    %254 = vadd.xlane.f32.xlu0 %v253
    %v255 = vpop.xlane.xlu0 %254
    %v256 = vsel %vm236, %v252, 0.0
    %257 = vadd.xlane.f32.xlu0 %v256
    %v258 = vpop.xlane.xlu0 %257
    %v259 = vlog2.pop %v255
    %v260 = vmul.f32 %v259, 0.6931472
    %v261 = vlog2.pop %v258
    %v262 = vmul.f32 %v261, 0.6931472
    %v263 = vadd.f32 %v239, %v260
    %v264 = vadd.f32 %v242, %v262
    %v265 = vsub.f32 1.0, %v234
    %v266 = vsub.f32 1.0, %v235
    %v267 = vmul.f32 %v265, %v246
    %v268 = vmul.f32 %v266, %v248
    %v269 = vsel %vm236, %v267, 0.0
    %270 = vadd.xlane.f32.xlu0 %v269
    %v271 = vpop.xlane.xlu0 %270
    %v272 = vsel %vm236, %v268, 0.0
    %273 = vadd.xlane.f32.xlu0 %v272
    %v274 = vpop.xlane.xlu0 %273
    %v275 = vlog2.pop %v271
    %v276 = vmul.f32 %v275, 0.6931472
    %v277 = vlog2.pop %v274
    %v278 = vmul.f32 %v277, 0.6931472
    %v279 = vadd.f32 %v239, %v276
    %v280 = vadd.f32 %v242, %v278
    %v281 = vmul.f32 %v215, %v195
    %v282 = vmul.f32 %v216, %v198
    %v283 = vsel %vm236, %v281, 0.0
    %284 = vadd.xlane.f32.xlu0 %v283
    %v285 = vpop.xlane.xlu0 %284
    %v286 = vsel %vm236, %v282, 0.0
    %287 = vadd.xlane.f32.xlu0 %v286
    %v288 = vpop.xlane.xlu0 %287
    %v289 = vsub.f32 %v285, %v263
    %v290 = vsub.f32 %v288, %v264
    %v291 = vmul.f32 %v221, %v195
    %v292 = vmul.f32 %v222, %v198
    %v293 = vsel %vm236, %v291, 0.0
    %294 = vadd.xlane.f32.xlu0 %v293
    %v295 = vpop.xlane.xlu0 %294
    %v296 = vsel %vm236, %v292, 0.0
    %297 = vadd.xlane.f32.xlu0 %v296
    %v298 = vpop.xlane.xlu0 %297
    %v299 = vsub.f32 %v295, %v279
    %v300 = vsub.f32 %v298, %v280
    %vm301 = vcmask 7168
    %v302 = vsel %vm301, %v289, 0.0
    %v303 = vsel %vm301, %v290, 0.0
    %v304 = vadd.f32 %v302, %v303
    %305 = vadd.xlane.f32.xlu0 %v304
    %v306 = vpop.xlane.xlu0 %305
    %v307 = vrot.slane %v306, 4
    %v308 = vadd.f32 %v306, %v307
    %v309 = vrot.slane %v308, 2
    %v310 = vadd.f32 %v308, %v309
    %v311 = vrot.slane %v310, 1
    %v312 = vadd.f32 %v310, %v311
    %s313 = vtos %v312
    %v314 = vsel %vm301, %v299, 0.0
    %v315 = vsel %vm301, %v300, 0.0
    %v316 = vadd.f32 %v314, %v315
    %317 = vadd.xlane.f32.xlu0 %v316
    %v318 = vpop.xlane.xlu0 %317
    %v319 = vrot.slane %v318, 4
    %v320 = vadd.f32 %v318, %v319
    %v321 = vrot.slane %v320, 2
    %v322 = vadd.f32 %v320, %v321
    %v323 = vrot.slane %v322, 1
    %v324 = vadd.f32 %v322, %v323
    %s325 = vtos %v324
    %v326 = vlaneseq
    %v327 = vshrl.u32 %v326, 7
    %vm328 = vcmp.lt.s32.totalorder %v327, 4
    %v329 = vstv %s313
    %v330 = vstv %s325
    %v331 = vsel %vm328, %v329, %v330
    %332 = vst [vmem:[#allocation2] sm:$0xff] %v331
    // Predicated region
    $region18: #{tpu_custom_call.1} parent=1 // pred_check
      _
    $region19: #{tpu_custom_call.1} parent=1 // pred_check_branch
      %334 = sbr.rel (0) target = $region21
    $region20: #{tpu_custom_call.1} parent=1 // pred_region
      %s336 = ssub.s32 128, 128
      %337 = vsyncadd [#allocation3], %s336
      %s339 = sshll.u32 [#allocation2], 4
      %s340 = int_to_ptr.vmem [resolvable:$true] %s339
      %342 = dma.vmem_to_hbm [thread:$0]  %s340, 128, %s4, [#allocation3]
    $region21: #{tpu_custom_call.1} parent=1 // pred_fallthru
      _
    // Predicated region
    $region22: #{tpu_custom_call.1} parent=1 // pred_check
      _
    $region23: #{tpu_custom_call.1} parent=1 // pred_check_branch
      %344 = sbr.rel (0) target = $region25
    $region24: #{tpu_custom_call.1} parent=1 // pred_region
      %345 = dma.done [#allocation3], 128
    $region25: #{tpu_custom_call.1} parent=1 // pred_fallthru
      _
    %346 = vsyncpa [#allocation3], 1

</llo_original>
